<compile_context>
chip_gen: v5e
topology: v5e:2x2
jax: 0.10.0
libtpu: 0.0.40
codegen_flags: <defaults>
</compile_context>

<pallas_src>
import jax
import jax.numpy as jnp
from jax.experimental import pallas as pl
from jax.experimental.pallas import tpu as pltpu


def _mlp_logsoftmax_kernel(x_ref, w1_ref, b1_ref, w2_ref, b2_ref, w3_ref, b3_ref,
                           o_ref):
    # Layer 1: Linear (bf16 in, f32 acc) + bias + ReLU   (Dropout = identity)
    h1 = jnp.dot(x_ref[...], w1_ref[...], preferred_element_type=jnp.float32)
    h1 = jnp.maximum(h1 + b1_ref[...], 0.0)

    # Layer 2: Linear + bias + ReLU   (Dropout = identity)
    h2 = jnp.dot(h1.astype(jnp.bfloat16), w2_ref[...],
                 preferred_element_type=jnp.float32)
    h2 = jnp.maximum(h2 + b2_ref[...], 0.0)

    # Layer 3: Linear -> logits (output padded to a lane-dense 128-wide block;
    # padded bias columns are -1e30 so exp() underflows to 0 below).
    logits = jnp.dot(h2.astype(jnp.bfloat16), w3_ref[...],
                     preferred_element_type=jnp.float32)
    logits = logits + b3_ref[...]

    # LogSoftmax along the last axis (numerically stable).
    m = jnp.max(logits, axis=-1, keepdims=True)
    shifted = logits - m
    lse = jnp.log(jnp.sum(jnp.exp(shifted), axis=-1, keepdims=True))
    o_ref[...] = (shifted - lse).astype(o_ref.dtype)


def pair_classifier_forward(x, params, *, block_b=256):
    """x: (B, dim_model) float32. params: dict of pre-transposed weights/biases."""
    w1, b1 = params["w1"], params["b1"]   # (D, H), (1, H)
    w2, b2 = params["w2"], params["b2"]   # (H, H), (1, H)
    w3, b3 = params["w3"], params["b3"]   # (H, C), (1, C)

    B, D = x.shape
    H = w1.shape[1]
    C = w3.shape[1]

    # Lane-dense output width (multiple of 128).
    C_pad = max(128, pl.cdiv(C, 128) * 128)
    w3p = jnp.zeros((H, C_pad), w3.dtype).at[:, :C].set(w3)
    b3p = jnp.full((1, C_pad), -1e30, jnp.float32).at[:, :C].set(b3)

    # bf16 matmul inputs (f32 accumulation in-kernel); biases stay f32.
    x_bf = x.astype(jnp.bfloat16)
    w1_bf = w1.astype(jnp.bfloat16)
    w2_bf = w2.astype(jnp.bfloat16)
    w3_bf = w3p.astype(jnp.bfloat16)

    # Batch tile: large (default 256) but clamped to B; for larger batches that
    # would otherwise fit in a single step, split so the grid has >=2 steps
    # (keeps both v7x TensorCores busy via dimension_semantics=("parallel",)).
    tb = min(block_b, B)
    if B >= 16 and pl.cdiv(B, tb) < 2:
        half = (((B + 1) // 2) + 7) // 8 * 8
        tb = min(tb, max(8, half))

    grid = (pl.cdiv(B, tb),)

    out = pl.pallas_call(
        _mlp_logsoftmax_kernel,
        out_shape=jax.ShapeDtypeStruct((B, C_pad), jnp.float32),
        grid_spec=pl.GridSpec(
            grid=grid,
            in_specs=[
                pl.BlockSpec((tb, D), lambda i: (i, 0)),       # x tile (batch-tiled)
                pl.BlockSpec((D, H), lambda i: (0, 0)),        # w1 (resident)
                pl.BlockSpec((1, H), lambda i: (0, 0)),        # b1
                pl.BlockSpec((H, H), lambda i: (0, 0)),        # w2
                pl.BlockSpec((1, H), lambda i: (0, 0)),        # b2
                pl.BlockSpec((H, C_pad), lambda i: (0, 0)),    # w3 (padded, resident)
                pl.BlockSpec((1, C_pad), lambda i: (0, 0)),    # b3 (padded)
            ],
            out_specs=pl.BlockSpec((tb, C_pad), lambda i: (i, 0)),
        ),
        compiler_params=pltpu.CompilerParams(
            dimension_semantics=("parallel",)),
    )(x_bf, w1_bf, b1, w2_bf, b2, w3_bf, b3p)

    # Strip the lane padding back to the real class count.
    return out[:, :C]


def init_params(key, dim_model, dim_hidden, n_classes):
    """Deterministic init matching PyTorch Linear shapes; weights stored
    pre-transposed as (in, out) for the kernel."""
    ks = jax.random.split(key, 6)

    def linear(kw, kb, fan_in, fan_out):
        # PyTorch default: U(-1/sqrt(fan_in), 1/sqrt(fan_in)) for both W and b
        bound = 1.0 / jnp.sqrt(fan_in)
        w = jax.random.uniform(kw, (fan_in, fan_out), jnp.float32, -bound, bound)
        b = jax.random.uniform(kb, (1, fan_out), jnp.float32, -bound, bound)
        return w, b

    w1, b1 = linear(ks[0], ks[1], dim_model, dim_hidden)
    w2, b2 = linear(ks[2], ks[3], dim_hidden, dim_hidden)
    w3, b3 = linear(ks[4], ks[5], dim_hidden, n_classes)
    return {"w1": w1, "b1": b1, "w2": w2, "b2": b2, "w3": w3, "b3": b3}


def reference_forward(x, p):
    h1 = jnp.maximum(x @ p["w1"] + p["b1"], 0.0)
    h2 = jnp.maximum(h1 @ p["w2"] + p["b2"], 0.0)
    logits = h2 @ p["w3"] + p["b3"]
    return jax.nn.log_softmax(logits, axis=-1)


if __name__ == "__main__":
    dim_model, dim_hidden, n_classes = 32, 32, 8
    batch = 8

    key = jax.random.PRNGKey(0)
    kx, kp = jax.random.split(key)
    x = jax.random.normal(kx, (batch, dim_model), dtype=jnp.float32)
    params = init_params(kp, dim_model, dim_hidden, n_classes)

    out = pair_classifier_forward(x, params)
    out = jax.block_until_ready(out)

    ref = reference_forward(x, params)
    assert out.shape == (batch, n_classes)
    # bf16 matmul inputs -> loosened tolerance vs. the f32 reference.
    assert jnp.allclose(out, ref, atol=5e-2, rtol=0.0), "mismatch vs reference"
    # Log-probs must still normalize.
    assert jnp.allclose(jnp.sum(jnp.exp(out), axis=-1), 1.0, atol=1e-3)

    print("KERNEL_OK")
</pallas_src>

<mosaic_0001>
module attributes {stable_mosaic.version = 11 : i64} {
  func.func @_mlp_logsoftmax_kernel(%arg0: i32, %arg1: memref<8x32xbf16, #tpu.memory_space<vmem>>, %arg2: memref<32x32xbf16, #tpu.memory_space<vmem>>, %arg3: memref<1x32xf32, #tpu.memory_space<vmem>>, %arg4: memref<32x32xbf16, #tpu.memory_space<vmem>>, %arg5: memref<1x32xf32, #tpu.memory_space<vmem>>, %arg6: memref<32x128xbf16, #tpu.memory_space<vmem>>, %arg7: memref<1x128xf32, #tpu.memory_space<vmem>>, %arg8: memref<8x128xf32, #tpu.memory_space<vmem>>) attributes {dimension_semantics = [#tpu.dimension_semantics<parallel>], iteration_bounds = array<i64: 1>, scalar_prefetch = 0 : i64, scratch_operands = 0 : i64, tpu.core_type = #tpu.core_type<tc>, window_params = [{transform_indices = @transform_0, window_bounds = array<i64: 8, 32>}, {pipeline_mode = #tpu.pipeline_mode<synchronous>, transform_indices = @transform_1, window_bounds = array<i64: 32, 32>}, {pipeline_mode = #tpu.pipeline_mode<synchronous>, transform_indices = @transform_2, window_bounds = array<i64: 1, 32>}, {pipeline_mode = #tpu.pipeline_mode<synchronous>, transform_indices = @transform_3, window_bounds = array<i64: 32, 32>}, {pipeline_mode = #tpu.pipeline_mode<synchronous>, transform_indices = @transform_4, window_bounds = array<i64: 1, 32>}, {pipeline_mode = #tpu.pipeline_mode<synchronous>, transform_indices = @transform_5, window_bounds = array<i64: 32, 128>}, {pipeline_mode = #tpu.pipeline_mode<synchronous>, transform_indices = @transform_6, window_bounds = array<i64: 1, 128>}, {transform_indices = @transform_7, window_bounds = array<i64: 8, 128>}]} {
    %c0 = arith.constant 0 : index
    %c0_0 = arith.constant 0 : index
    %0 = vector.load %arg1[%c0, %c0_0] : memref<8x32xbf16, #tpu.memory_space<vmem>>, vector<8x32xbf16>
    %c0_1 = arith.constant 0 : index
    %c0_2 = arith.constant 0 : index
    %1 = vector.load %arg2[%c0_1, %c0_2] : memref<32x32xbf16, #tpu.memory_space<vmem>>, vector<32x32xbf16>
    %cst = arith.constant dense<0.000000e+00> : vector<8x32xf32>
    %2 = tpu.matmul %0, %1, %cst {dimension_numbers = #tpu.dot_dimension_numbers<[1], [0], [0], [1], [0, 0, 1, 1], [], []>} : vector<8x32xbf16>, vector<32x32xbf16>, vector<8x32xf32> -> vector<8x32xf32>
    %c0_3 = arith.constant 0 : index
    %c0_4 = arith.constant 0 : index
    %3 = vector.load %arg3[%c0_3, %c0_4] : memref<1x32xf32, #tpu.memory_space<vmem>>, vector<1x32xf32>
    %4 = vector.broadcast %3 : vector<1x32xf32> to vector<8x32xf32>
    %5 = arith.addf %2, %4 : vector<8x32xf32>
    %cst_5 = arith.constant 0.000000e+00 : f32
    %6 = vector.broadcast %cst_5 : f32 to vector<8x32xf32>
    %7 = arith.maximumf %5, %6 : vector<8x32xf32>
    %8 = arith.truncf %7 : vector<8x32xf32> to vector<8x32xbf16>
    %c0_6 = arith.constant 0 : index
    %c0_7 = arith.constant 0 : index
    %9 = vector.load %arg4[%c0_6, %c0_7] : memref<32x32xbf16, #tpu.memory_space<vmem>>, vector<32x32xbf16>
    %cst_8 = arith.constant dense<0.000000e+00> : vector<8x32xf32>
    %10 = tpu.matmul %8, %9, %cst_8 {dimension_numbers = #tpu.dot_dimension_numbers<[1], [0], [0], [1], [0, 0, 1, 1], [], []>} : vector<8x32xbf16>, vector<32x32xbf16>, vector<8x32xf32> -> vector<8x32xf32>
    %c0_9 = arith.constant 0 : index
    %c0_10 = arith.constant 0 : index
    %11 = vector.load %arg5[%c0_9, %c0_10] : memref<1x32xf32, #tpu.memory_space<vmem>>, vector<1x32xf32>
    %12 = vector.broadcast %11 : vector<1x32xf32> to vector<8x32xf32>
    %13 = arith.addf %10, %12 : vector<8x32xf32>
    %cst_11 = arith.constant 0.000000e+00 : f32
    %14 = vector.broadcast %cst_11 : f32 to vector<8x32xf32>
    %15 = arith.maximumf %13, %14 : vector<8x32xf32>
    %16 = arith.truncf %15 : vector<8x32xf32> to vector<8x32xbf16>
    %c0_12 = arith.constant 0 : index
    %c0_13 = arith.constant 0 : index
    %17 = vector.load %arg6[%c0_12, %c0_13] : memref<32x128xbf16, #tpu.memory_space<vmem>>, vector<32x128xbf16>
    %cst_14 = arith.constant dense<0.000000e+00> : vector<8x128xf32>
    %18 = tpu.matmul %16, %17, %cst_14 {dimension_numbers = #tpu.dot_dimension_numbers<[1], [0], [0], [1], [0, 0, 1, 1], [], []>} : vector<8x32xbf16>, vector<32x128xbf16>, vector<8x128xf32> -> vector<8x128xf32>
    %c0_15 = arith.constant 0 : index
    %c0_16 = arith.constant 0 : index
    %19 = vector.load %arg7[%c0_15, %c0_16] : memref<1x128xf32, #tpu.memory_space<vmem>>, vector<1x128xf32>
    %20 = vector.broadcast %19 : vector<1x128xf32> to vector<8x128xf32>
    %21 = arith.addf %18, %20 : vector<8x128xf32>
    %cst_17 = arith.constant dense<0xFF800000> : vector<8xf32>
    %22 = vector.multi_reduction <maximumf>, %21, %cst_17 [1] : vector<8x128xf32> to vector<8xf32>
    %23 = vector.shape_cast %22 : vector<8xf32> to vector<8x1xf32>
    %24 = vector.broadcast %23 : vector<8x1xf32> to vector<8x128xf32>
    %25 = arith.subf %21, %24 : vector<8x128xf32>
    %26 = math.exp %25 : vector<8x128xf32>
    %cst_18 = arith.constant dense<0.000000e+00> : vector<8xf32>
    %27 = vector.multi_reduction <add>, %26, %cst_18 [1] : vector<8x128xf32> to vector<8xf32>
    %28 = vector.shape_cast %27 : vector<8xf32> to vector<8x1xf32>
    %29 = math.log %28 : vector<8x1xf32>
    %30 = vector.broadcast %29 : vector<8x1xf32> to vector<8x128xf32>
    %31 = arith.subf %25, %30 : vector<8x128xf32>
    %c0_19 = arith.constant 0 : index
    %c0_20 = arith.constant 0 : index
    %32 = vector.load %arg8[%c0_19, %c0_20] : memref<8x128xf32, #tpu.memory_space<vmem>>, vector<8x128xf32>
    tpu.vector_store %arg8[%c0_19, %c0_20], %31 {strides = array<i32>} : memref<8x128xf32, #tpu.memory_space<vmem>>, vector<8x128xf32>,
    return
  }
  func.func @transform_0(%arg0: i32) -> (i32, i32) {
    %c0_i32 = arith.constant 0 : i32
    %c0_i32_0 = arith.constant 0 : i32
    return %arg0, %c0_i32 : i32, i32
  }
  func.func @transform_1(%arg0: i32) -> (i32, i32) {
    %c0_i32 = arith.constant 0 : i32
    %c0_i32_0 = arith.constant 0 : i32
    %c0_i32_1 = arith.constant 0 : i32
    return %c0_i32, %c0_i32_0 : i32, i32
  }
  func.func @transform_2(%arg0: i32) -> (i32, i32) {
    %c0_i32 = arith.constant 0 : i32
    %c0_i32_0 = arith.constant 0 : i32
    %c0_i32_1 = arith.constant 0 : i32
    return %c0_i32, %c0_i32_0 : i32, i32
  }
  func.func @transform_3(%arg0: i32) -> (i32, i32) {
    %c0_i32 = arith.constant 0 : i32
    %c0_i32_0 = arith.constant 0 : i32
    %c0_i32_1 = arith.constant 0 : i32
    return %c0_i32, %c0_i32_0 : i32, i32
  }
  func.func @transform_4(%arg0: i32) -> (i32, i32) {
    %c0_i32 = arith.constant 0 : i32
    %c0_i32_0 = arith.constant 0 : i32
    %c0_i32_1 = arith.constant 0 : i32
    return %c0_i32, %c0_i32_0 : i32, i32
  }
  func.func @transform_5(%arg0: i32) -> (i32, i32) {
    %c0_i32 = arith.constant 0 : i32
    %c0_i32_0 = arith.constant 0 : i32
    %c0_i32_1 = arith.constant 0 : i32
    return %c0_i32, %c0_i32_0 : i32, i32
  }
  func.func @transform_6(%arg0: i32) -> (i32, i32) {
    %c0_i32 = arith.constant 0 : i32
    %c0_i32_0 = arith.constant 0 : i32
    %c0_i32_1 = arith.constant 0 : i32
    return %c0_i32, %c0_i32_0 : i32, i32
  }
  func.func @transform_7(%arg0: i32) -> (i32, i32) {
    %c0_i32 = arith.constant 0 : i32
    %c0_i32_0 = arith.constant 0 : i32
    return %arg0, %c0_i32 : i32, i32
  }
}

</mosaic_0001>

<llo_original>
// kernel: tpu_custom_call.1
$region0: #{tpu_custom_call.1}
  #allocation0 [shape = 'u32[]', space=smem, size = 0x4, offset = 0x4, fixed_abs, tag = 'smem constant byte address 0x4 - core index']
  #allocation1 [shape = 'u32[72,128]{1,0:T(1,128)}', space=vmem, size = 0x9000, scoped, tag = 'internal scratch']
  %s0 = inlined_call_operand.hbm [shape: bf16[8,32], index: 0, kind: input, shape index: {}]
  %s1 = inlined_call_operand.hbm [shape: bf16[32,32], index: 1, kind: input, shape index: {}]
  %s2 = inlined_call_operand.vmem [shape: f32[1,32], index: 2, kind: input, shape index: {}]
  %s3 = inlined_call_operand.hbm [shape: bf16[32,32], index: 3, kind: input, shape index: {}]
  %s4 = inlined_call_operand.vmem [shape: f32[1,32], index: 4, kind: input, shape index: {}]
  %s5 = inlined_call_operand.hbm [shape: bf16[32,128], index: 5, kind: input, shape index: {}]
  %s6 = inlined_call_operand.vmem [shape: f32[1,128], index: 6, kind: input, shape index: {}]
  %s7 = inlined_call_operand.hbm [shape: f32[8,128], index: 7, kind: output, shape index: {}]
  %s8 = sld [smem:[#allocation0]]
  $region54: #{tpu_custom_call.1} parent=0
    _
  %s10 = ssub.s32 1, %s8
  %s11 = scalar_select 0, %s10, %s8
  $region1: #{tpu_custom_call.1} parent=0
    #allocation2 [shape = 'u8[2048]{0}', space=vmem, size = 0x800, scoped, tag = 'input window, operand 0, single buffered']
    #allocation3 [shape = 's32[1]{0}', space=sflag, size = 0x4, scoped, tag = 'scoped memory for tpu_custom_call.1']
    #allocation4 [shape = 's32[1]{0}', space=sflag, size = 0x4, scoped, tag = 'scoped memory for tpu_custom_call.1']
    #allocation5 [shape = 'u8[8192]{0}', space=vmem, size = 0x2000, scoped, tag = 'input window, operand 1, single buffered']
    #allocation6 [shape = 's32[1]{0}', space=sflag, size = 0x4, scoped, tag = 'scoped memory for tpu_custom_call.1']
    #allocation7 [shape = 'u8[8192]{0}', space=vmem, size = 0x2000, scoped, tag = 'input window, operand 3, single buffered']
    #allocation8 [shape = 'u8[8192]{0}', space=vmem, size = 0x2000, scoped, tag = 'input window, operand 5, single buffered']
    #allocation9 [shape = 's32[1]{0}', space=sflag, size = 0x4, scoped, tag = 'scoped memory for tpu_custom_call.1']
    #allocation10 [shape = 'u8[4096]{0}', space=vmem, size = 0x1000, scoped, tag = 'output window, operand 0, single buffered']
    %12 = vsyncpa [#allocation3], 0
    %13 = vsyncpa [#allocation6], 0
    %14 = vsyncpa [#allocation9], 0
    %15 = vsyncpa [#allocation4], 0
    // Predicated region
    $region2: #{tpu_custom_call.1} parent=1 // pred_check
      _
    $region3: #{tpu_custom_call.1} parent=1 // pred_check_branch
      %17 = sbr.rel (0) target = $region5
    $region4: #{tpu_custom_call.1} parent=1 // pred_region
      %19 = vsyncadd [#allocation3], 0
      %s21 = sshll.u32 %s0, 4
      %s22 = int_to_ptr.hbm [resolvable:$true] %s21
      %s23 = sshll.u32 [#allocation2], 4
      %s24 = int_to_ptr.vmem [resolvable:$true] %s23
      %26 = dma.hbm_to_vmem [thread:$0]  %s22, 64, %s24, [#allocation3]
    $region5: #{tpu_custom_call.1} parent=1 // pred_fallthru
      _
    // Predicated region
    $region6: #{tpu_custom_call.1} parent=1 // pred_check
      _
    $region7: #{tpu_custom_call.1} parent=1 // pred_check_branch
      %28 = sbr.rel (0) target = $region9
    $region8: #{tpu_custom_call.1} parent=1 // pred_region
      %30 = vsyncadd [#allocation6], 0
      %s31 = sshll.u32 %s1, 4
      %s32 = int_to_ptr.hbm [resolvable:$true] %s31
      %s33 = sshll.u32 [#allocation5], 4
      %s34 = int_to_ptr.vmem [resolvable:$true] %s33
      %39 = dma.hbm_to_vmem [thread:$0]  %s32, 256, %s34, [#allocation6], 64, 64, 4
    $region9: #{tpu_custom_call.1} parent=1 // pred_fallthru
      _
    // Predicated region
    $region10: #{tpu_custom_call.1} parent=1 // pred_check
      _
    $region11: #{tpu_custom_call.1} parent=1 // pred_check_branch
      %41 = sbr.rel (0) target = $region13
    $region12: #{tpu_custom_call.1} parent=1 // pred_region
      _
    $region13: #{tpu_custom_call.1} parent=1 // pred_fallthru
      _
    // Predicated region
    $region14: #{tpu_custom_call.1} parent=1 // pred_check
      _
    $region15: #{tpu_custom_call.1} parent=1 // pred_check_branch
      %43 = sbr.rel (0) target = $region17
    $region16: #{tpu_custom_call.1} parent=1 // pred_region
      %45 = vsyncadd [#allocation6], 0
      %s46 = sshll.u32 %s3, 4
      %s47 = int_to_ptr.hbm [resolvable:$true] %s46
      %s48 = sshll.u32 [#allocation7], 4
      %s49 = int_to_ptr.vmem [resolvable:$true] %s48
      %54 = dma.hbm_to_vmem [thread:$0]  %s47, 256, %s49, [#allocation6], 64, 64, 4
    $region17: #{tpu_custom_call.1} parent=1 // pred_fallthru
      _
    // Predicated region
    $region18: #{tpu_custom_call.1} parent=1 // pred_check
      _
    $region19: #{tpu_custom_call.1} parent=1 // pred_check_branch
      %56 = sbr.rel (0) target = $region21
    $region20: #{tpu_custom_call.1} parent=1 // pred_region
      _
    $region21: #{tpu_custom_call.1} parent=1 // pred_fallthru
      _
    // Predicated region
    $region22: #{tpu_custom_call.1} parent=1 // pred_check
      _
    $region23: #{tpu_custom_call.1} parent=1 // pred_check_branch
      %58 = sbr.rel (0) target = $region25
    $region24: #{tpu_custom_call.1} parent=1 // pred_region
      %60 = vsyncadd [#allocation9], 0
      %s61 = sshll.u32 %s5, 4
      %s62 = int_to_ptr.hbm [resolvable:$true] %s61
      %s63 = sshll.u32 [#allocation8], 4
      %s64 = int_to_ptr.vmem [resolvable:$true] %s63
      %69 = dma.hbm_to_vmem [thread:$0]  %s62, 256, %s64, [#allocation9], 64, 64, 4
    $region25: #{tpu_custom_call.1} parent=1 // pred_fallthru
      _
    // Predicated region
    $region26: #{tpu_custom_call.1} parent=1 // pred_check
      _
    $region27: #{tpu_custom_call.1} parent=1 // pred_check_branch
      %71 = sbr.rel (0) target = $region29
    $region28: #{tpu_custom_call.1} parent=1 // pred_region
      _
    $region29: #{tpu_custom_call.1} parent=1 // pred_fallthru
      _
    // Predicated region
    $region30: #{tpu_custom_call.1} parent=1 // pred_check
      _
    $region31: #{tpu_custom_call.1} parent=1 // pred_check_branch
      %73 = sbr.rel (0) target = $region33
    $region32: #{tpu_custom_call.1} parent=1 // pred_region
      %75 = dma.done [#allocation3], 64
    $region33: #{tpu_custom_call.1} parent=1 // pred_fallthru
      _
    // Predicated region
    $region34: #{tpu_custom_call.1} parent=1 // pred_check
      _
    $region35: #{tpu_custom_call.1} parent=1 // pred_check_branch
      %77 = sbr.rel (0) target = $region37
    $region36: #{tpu_custom_call.1} parent=1 // pred_region
      %79 = dma.done [#allocation6], 256
    $region37: #{tpu_custom_call.1} parent=1 // pred_fallthru
      _
    // Predicated region
    $region38: #{tpu_custom_call.1} parent=1 // pred_check
      _
    $region39: #{tpu_custom_call.1} parent=1 // pred_check_branch
      %81 = sbr.rel (0) target = $region41
    $region40: #{tpu_custom_call.1} parent=1 // pred_region
      %83 = dma.done [#allocation6], 256
    $region41: #{tpu_custom_call.1} parent=1 // pred_fallthru
      _
    // Predicated region
    $region42: #{tpu_custom_call.1} parent=1 // pred_check
      _
    $region43: #{tpu_custom_call.1} parent=1 // pred_check_branch
      %85 = sbr.rel (0) target = $region45
    $region44: #{tpu_custom_call.1} parent=1 // pred_region
      %87 = dma.done [#allocation9], 256
    $region45: #{tpu_custom_call.1} parent=1 // pred_fallthru
      _
    %v89 = vld [vmem:[#allocation2] sm:$0xf]
    %v90 = vld [vmem:[#allocation5] sm:$0xf]
    %v91 = vld [vmem:[#allocation5 + $0x4] sm:$0xf]
    %v92 = vld [vmem:[#allocation5 + $0x8] sm:$0xf]
    %v93 = vld [vmem:[#allocation5 + $0xc] sm:$0xf]
    %v94 = vld [vmem:[%s2] sm:$0x1]
    %v96 = vperm.slane %v94, 0
    %v102 = vunpack.c.l.b16 %v90
    %v103 = vunpack.c.l.b16 %v91
    %v104 = vunpack.c.l.b16 %v92
    %v105 = vunpack.c.l.b16 %v93
    %v106 = vpack.c.b16 %v103, %v102
    %v107 = vpack.c.b16 %v105, %v104
    %vm110 = vcmask 261120
    %v112 = vsel %vm110, %v89, 0
    %114 = vmatpush.bf16.msra.mxu0 0
    %115 = vmatpush.bf16.msra.mxu0 0
    %116 = vmatpush.bf16.msra.mxu0 0
    %117 = vmatpush.bf16.msra.mxu0 0
    %118 = vmatpush.bf16.msra.mxu0 0
    %119 = vmatpush.bf16.msra.mxu0 0
    %120 = vmatpush.bf16.msra.mxu0 %v107
    %121 = vmatpush.bf16.msra.mxu0 %v106
    %122 = vmatmul.bf16.gmra.mxu0 %v112
    %v123 = vpop.f32.mrf.mxu0
    %v124 = vadd.f32 %v96, %v123
    %v125 = vpop.f32.mrf.mxu0
    %126 = vdwg.mxu0
    %v127 = vmax.f32 %v124, 0.0
    %v128 = vpack.c.bf16 %v127, %v127
    %v129 = vld [vmem:[#allocation7] sm:$0xf]
    %v130 = vld [vmem:[#allocation7 + $0x4] sm:$0xf]
    %v131 = vld [vmem:[#allocation7 + $0x8] sm:$0xf]
    %v132 = vld [vmem:[#allocation7 + $0xc] sm:$0xf]
    %v133 = vld [vmem:[%s4] sm:$0x1]
    %v135 = vperm.slane %v133, 0
    %v141 = vunpack.c.l.b16 %v129
    %v142 = vunpack.c.l.b16 %v130
    %v143 = vunpack.c.l.b16 %v131
    %v144 = vunpack.c.l.b16 %v132
    %v145 = vpack.c.b16 %v142, %v141
    %v146 = vpack.c.b16 %v144, %v143
    %v150 = vsel %vm110, %v128, 0
    %152 = vmatpush.bf16.msra.mxu0 0
    %153 = vmatpush.bf16.msra.mxu0 0
    %154 = vmatpush.bf16.msra.mxu0 0
    %155 = vmatpush.bf16.msra.mxu0 0
    %156 = vmatpush.bf16.msra.mxu0 0
    %157 = vmatpush.bf16.msra.mxu0 0
    %158 = vmatpush.bf16.msra.mxu0 %v146
    %159 = vmatpush.bf16.msra.mxu0 %v145
    %160 = vmatmul.bf16.gmra.mxu0 %v150
    %v161 = vpop.f32.mrf.mxu0
    %v162 = vadd.f32 %v135, %v161
    %v163 = vpop.f32.mrf.mxu0
    %164 = vdwg.mxu0
    %v165 = vmax.f32 %v162, 0.0
    %v166 = vpack.c.bf16 %v165, %v165
    %v167 = vld [vmem:[#allocation8] sm:$0xf]
    %v168 = vld [vmem:[#allocation8 + $0x4] sm:$0xf]
    %v169 = vld [vmem:[#allocation8 + $0x8] sm:$0xf]
    %v170 = vld [vmem:[#allocation8 + $0xc] sm:$0xf]
    %v171 = vld [vmem:[%s6] sm:$0x1]
    %v173 = vperm.slane %v171, 0
    %v179 = vunpack.c.l.b16 %v167
    %v180 = vunpack.c.l.b16 %v168
    %v181 = vunpack.c.l.b16 %v169
    %v182 = vunpack.c.l.b16 %v170
    %v183 = vpack.c.b16 %v180, %v179
    %v184 = vpack.c.b16 %v182, %v181
    %v188 = vsel %vm110, %v166, 0
    %190 = vmatpush.bf16.msra.mxu0 0
    %191 = vmatpush.bf16.msra.mxu0 0
    %192 = vmatpush.bf16.msra.mxu0 0
    %193 = vmatpush.bf16.msra.mxu0 0
    %194 = vmatpush.bf16.msra.mxu0 0
    %195 = vmatpush.bf16.msra.mxu0 0
    %196 = vmatpush.bf16.msra.mxu0 %v184
    %197 = vmatpush.bf16.msra.mxu0 %v183
    %198 = vmatmul.bf16.gmra.mxu0 %v188
    %v199 = vpop.f32.mrf.mxu0
    %v200 = vadd.f32 %v173, %v199
    %v201 = vpop.f32.mrf.mxu0
    %202 = vdwg.mxu0
    %203 = vmax.xlane.f32.xlu0 %v200
    %v204 = vpop.xlane.xlu0 %203
    %v205 = vsub.f32 %v200, %v204
    %v206 = vmul.f32 %v205, 1.442695
    %v207 = vpow.pop %v206
    %208 = vadd.xlane.f32.xlu0 %v207
    %v209 = vpop.xlane.xlu0 %208
    %v210 = vlog2.pop %v209
    %v211 = vmul.f32 %v210, 0.6931472
    %v212 = vsub.f32 %v205, %v211
    %213 = vst [vmem:[#allocation10] sm:$0xff] %v212
    // Predicated region
    $region46: #{tpu_custom_call.1} parent=1 // pred_check
      _
    $region47: #{tpu_custom_call.1} parent=1 // pred_check_branch
      %215 = sbr.rel (0) target = $region49
    $region48: #{tpu_custom_call.1} parent=1 // pred_region
      %217 = vsyncadd [#allocation4], 0
      %s219 = sshll.u32 [#allocation10], 4
      %s220 = int_to_ptr.vmem [resolvable:$true] %s219
      %s221 = sshll.u32 %s7, 4
      %s222 = int_to_ptr.hbm [resolvable:$true] %s221
      %224 = dma.vmem_to_hbm [thread:$0]  %s220, 128, %s222, [#allocation4]
    $region49: #{tpu_custom_call.1} parent=1 // pred_fallthru
      _
    // Predicated region
    $region50: #{tpu_custom_call.1} parent=1 // pred_check
      _
    $region51: #{tpu_custom_call.1} parent=1 // pred_check_branch
      %226 = sbr.rel (0) target = $region53
    $region52: #{tpu_custom_call.1} parent=1 // pred_region
      %228 = dma.done [#allocation4], 128
    $region53: #{tpu_custom_call.1} parent=1 // pred_fallthru
      _
    %229 = vsyncpa [#allocation3], 1
    %230 = vsyncpa [#allocation6], 1
    %231 = vsyncpa [#allocation9], 1
    %232 = vsyncpa [#allocation4], 1

</llo_original>
